<compile_context>
chip_gen: v7x
topology: tpu7x:2x2x1
jax: 0.10.0
libtpu: 0.0.40
codegen_flags: <defaults>
</compile_context>

<pallas_src>
import functools

import numpy as np

import jax
import jax.numpy as jnp
from jax.experimental import pallas as pl
from jax.experimental.pallas import tpu as pltpu


def _round_up(x, m):
    return (x + m - 1) // m * m


# ---------------------------------------------------------------------------
# Static spatial operators: adaptive-avg-pool and bilinear upsample as matrices.
# Built once per (H, W, sizes) at trace time (pure numpy -> XLA constants).
# ---------------------------------------------------------------------------

@functools.lru_cache(maxsize=None)
def _spatial_operators(H, W, sizes):
    """Returns A_all (S_total, H*W) pooling matrix, R_all (H*W, S_total) bilinear
    upsample matrix (align_corners=False, PyTorch semantics), per-stage offsets."""

    def pool_1d(out, inp):
        m = np.zeros((out, inp), np.float32)
        for i in range(out):
            a = (i * inp) // out
            b = -((-(i + 1) * inp) // out)  # ceil((i+1)*inp/out)
            m[i, a:b] = 1.0 / (b - a)
        return m

    def up_1d(out, inp):
        m = np.zeros((out, inp), np.float32)
        scale = inp / out
        for d in range(out):
            src = max((d + 0.5) * scale - 0.5, 0.0)
            i0 = min(int(np.floor(src)), inp - 1)
            i1 = min(i0 + 1, inp - 1)
            lam = src - i0
            m[d, i0] += 1.0 - lam
            m[d, i1] += lam
        return m

    a_blocks, r_blocks, offsets = [], [], []
    off = 0
    for s in sizes:
        a_blocks.append(np.kron(pool_1d(s, H), pool_1d(s, W)))  # (s*s, H*W)
        r_blocks.append(np.kron(up_1d(H, s), up_1d(W, s)))      # (H*W, s*s)
        offsets.append(off)
        off += s * s
    A_all = np.concatenate(a_blocks, axis=0)
    R_all = np.concatenate(r_blocks, axis=1)
    return A_all, R_all, tuple(offsets)


# ---------------------------------------------------------------------------
# The single fused Pallas kernel: out = ReLU(X @ W_feats + R @ C + b)
# ---------------------------------------------------------------------------

def _psp_bottleneck_kernel(x_ref, r_ref, c_ref, w_ref, b_ref, o_ref):
    acc = jnp.dot(x_ref[...], w_ref[...], preferred_element_type=jnp.float32)
    acc = acc + jnp.dot(r_ref[...], c_ref[...], preferred_element_type=jnp.float32)
    acc = acc + b_ref[...]
    o_ref[...] = jnp.maximum(acc, 0.0).astype(o_ref.dtype)


def psp_bottleneck(x3, r_all, c_all, w_feats, bias_row, *, tile_hw, tile_cout):
    """x3: (N, HW_pad, C), r_all: (HW_pad, S_pad), c_all: (N, S_pad, Cout_pad),
    w_feats: (C, Cout_pad), bias_row: (1, Cout_pad) -> (N, HW_pad, Cout_pad)."""
    N, HW_pad, C = x3.shape
    S_pad = r_all.shape[1]
    Cout_pad = w_feats.shape[1]
    grid = (N, HW_pad // tile_hw, Cout_pad // tile_cout)
    return pl.pallas_call(
        _psp_bottleneck_kernel,
        out_shape=jax.ShapeDtypeStruct((N, HW_pad, Cout_pad), jnp.float32),
        grid=grid,
        in_specs=[
            pl.BlockSpec((None, tile_hw, C), lambda n, t, j: (n, t, 0)),
            pl.BlockSpec((tile_hw, S_pad), lambda n, t, j: (t, 0)),
            pl.BlockSpec((None, S_pad, tile_cout), lambda n, t, j: (n, 0, j)),
            pl.BlockSpec((C, tile_cout), lambda n, t, j: (0, j)),
            pl.BlockSpec((1, tile_cout), lambda n, t, j: (0, j)),
        ],
        out_specs=pl.BlockSpec((None, tile_hw, tile_cout), lambda n, t, j: (n, t, j)),
        compiler_params=pltpu.CompilerParams(
            dimension_semantics=("parallel", "parallel", "parallel")),
    )(x3, r_all, c_all, w_feats, bias_row)


# ---------------------------------------------------------------------------
# Parameters (same layout as the original module)
# ---------------------------------------------------------------------------

def init_downsample_params(key, features, out_features, sizes):
    ks = jax.random.split(key, len(sizes) + 2)
    params = {"stage_w": [], "sizes": tuple(sizes)}
    for i, _ in enumerate(sizes):
        # stage conv: Conv2d(features, features, 1, bias=False) as (Cin, Cout)
        params["stage_w"].append(
            jax.random.normal(ks[i], (features, features), jnp.float32) * 0.1
        )
    cin_total = features * (len(sizes) + 1)
    params["bottleneck_w"] = (
        jax.random.normal(ks[-2], (cin_total, out_features), jnp.float32) * 0.1
    )
    params["bottleneck_b"] = (
        jax.random.normal(ks[-1], (out_features,), jnp.float32) * 0.1
    )
    return params


# ---------------------------------------------------------------------------
# DownSample forward (one Pallas call total)
# ---------------------------------------------------------------------------

def downsample_forward(params, feats):
    """feats: (N, C, H, W) NCHW -> (N, out_features, H, W) NCHW."""
    N, C, H, W = feats.shape
    sizes = tuple(params["sizes"])
    n_stages = len(sizes)
    HW = H * W
    Cout = params["bottleneck_w"].shape[1]

    # Static pooling / bilinear-upsample operators.
    A_all_np, R_all_np, offsets = _spatial_operators(H, W, sizes)
    S_total = A_all_np.shape[0]

    # Lane-dense / MXU-aligned padded sizes and tile choices.
    Cout_pad = _round_up(max(Cout, 128), 128)
    tile_cout = min(512, Cout_pad)
    Cout_pad = _round_up(Cout_pad, tile_cout)
    S_pad = _round_up(max(S_total, 128), 128)
    tile_hw = min(512, _round_up(HW, 8))
    HW_pad = _round_up(HW, tile_hw)

    # NCHW -> NHWC once, flatten spatial.
    x3 = jnp.transpose(feats, (0, 2, 3, 1)).reshape(N, HW, C)

    # Fold each stage's 1x1 conv into its bottleneck row-group.
    wb = params["bottleneck_w"]                                     # (5C, Cout)
    wb_pad = jnp.pad(wb, ((0, 0), (0, Cout_pad - Cout)))
    w_feats = wb_pad[n_stages * C:(n_stages + 1) * C]               # (C, Cout_pad)

    # Adaptive-avg-pool for all stages at once: (N, S_total, C)  (tiny).
    A_all = jnp.asarray(A_all_np, jnp.float32)
    pooled = jnp.einsum("sq,nqc->nsc", A_all, x3)

    # Per-stage folded contribution in the pooled (tiny) domain.
    contribs = []
    for i, s in enumerate(sizes):
        w_fold = params["stage_w"][i] @ wb_pad[i * C:(i + 1) * C]   # (C, Cout_pad)
        p_s = pooled[:, offsets[i]:offsets[i] + s * s, :]           # (N, s*s, C)
        contribs.append(jnp.einsum("nsc,co->nso", p_s, w_fold))
    c_all = jnp.concatenate(contribs, axis=1)                       # (N, S_total, Cout_pad)
    c_all = jnp.pad(c_all, ((0, 0), (0, S_pad - S_total), (0, 0)))

    r_all = jnp.asarray(R_all_np, jnp.float32)
    r_all = jnp.pad(r_all, ((0, HW_pad - HW), (0, S_pad - S_total)))
    x3_pad = jnp.pad(x3, ((0, 0), (0, HW_pad - HW), (0, 0)))
    bias_row = jnp.pad(params["bottleneck_b"], (0, Cout_pad - Cout)).reshape(1, Cout_pad)

    out = psp_bottleneck(x3_pad, r_all, c_all, w_feats, bias_row,
                         tile_hw=tile_hw, tile_cout=tile_cout)
    out = out[:, :HW, :Cout].reshape(N, H, W, Cout)
    return jnp.transpose(out, (0, 3, 1, 2))                         # NHWC -> NCHW once


# ---------------------------------------------------------------------------
# Independent plain-JAX reference (straightforward PyTorch-semantics path)
# ---------------------------------------------------------------------------

def _adaptive_avg_pool2d_ref(x, s):
    N, C, H, W = x.shape
    rows = []
    for i in range(s):
        h0 = (i * H) // s
        h1 = -((-(i + 1) * H) // s)
        cols = []
        for j in range(s):
            w0 = (j * W) // s
            w1 = -((-(j + 1) * W) // s)
            cols.append(jnp.mean(x[:, :, h0:h1, w0:w1], axis=(2, 3)))
        rows.append(jnp.stack(cols, axis=-1))
    return jnp.stack(rows, axis=-2)


def _source_index_ref(out_size, in_size):
    scale = in_size / out_size
    d = jnp.arange(out_size, dtype=jnp.float32)
    src = jnp.maximum((d + 0.5) * scale - 0.5, 0.0)
    i0 = jnp.minimum(jnp.floor(src).astype(jnp.int32), in_size - 1)
    i1 = jnp.minimum(i0 + 1, in_size - 1)
    lam = jnp.clip(src - i0.astype(jnp.float32), 0.0, 1.0)
    return i0, i1, lam


def _resize_bilinear_ref(x, H, W):
    _, _, h, w = x.shape
    hi0, hi1, hl = _source_index_ref(H, h)
    wi0, wi1, wl = _source_index_ref(W, w)
    top = x[:, :, hi0, :]
    bot = x[:, :, hi1, :]
    rows = top * (1.0 - hl)[None, None, :, None] + bot * hl[None, None, :, None]
    left = rows[:, :, :, wi0]
    right = rows[:, :, :, wi1]
    return left * (1.0 - wl)[None, None, None, :] + right * wl[None, None, None, :]


def downsample_reference(params, feats):
    N, C, H, W = feats.shape
    priors = []
    for s, w_s in zip(params["sizes"], params["stage_w"]):
        pooled = _adaptive_avg_pool2d_ref(feats, s)
        conv = jnp.einsum("ncij,cd->ndij", pooled, w_s)
        priors.append(_resize_bilinear_ref(conv, H, W))
    priors.append(feats)
    cat = jnp.concatenate(priors, axis=1)
    out = jnp.einsum("nkij,kd->ndij", cat, params["bottleneck_w"])
    out = out + params["bottleneck_b"][None, :, None, None]
    return jnp.maximum(out, 0.0)


if __name__ == "__main__":
    key = jax.random.PRNGKey(0)

    # ---- primary small test -------------------------------------------------
    k_x, k_p = jax.random.split(key)
    N, C, H, W = 2, 4, 16, 16
    out_features = 32
    sizes = (1, 2, 3, 6)

    x = jax.random.normal(k_x, (N, C, H, W), jnp.float32)
    params = init_downsample_params(k_p, C, out_features, sizes)

    fwd = jax.jit(functools.partial(downsample_forward, params))
    out = fwd(x)
    jax.block_until_ready(out)

    assert out.shape == (N, out_features, H, W), out.shape
    ref = downsample_reference(params, x)
    err = float(jnp.max(jnp.abs(out - ref)))
    assert err < 1e-3, f"max abs err vs reference: {err}"
    assert bool(jnp.all(out >= 0.0))  # ReLU output is non-negative

    # ---- secondary test: non-square spatial, padding path -------------------
    k_x2, k_p2 = jax.random.split(jax.random.PRNGKey(1))
    N2, C2, H2, W2 = 1, 6, 10, 12
    params2 = init_downsample_params(k_p2, C2, 48, sizes)
    x2 = jax.random.normal(k_x2, (N2, C2, H2, W2), jnp.float32)
    out2 = jax.jit(functools.partial(downsample_forward, params2))(x2)
    jax.block_until_ready(out2)
    ref2 = downsample_reference(params2, x2)
    err2 = float(jnp.max(jnp.abs(out2 - ref2)))
    assert out2.shape == (N2, 48, H2, W2), out2.shape
    assert err2 < 1e-3, f"max abs err vs reference (test 2): {err2}"

    print("KERNEL_OK")
</pallas_src>

<mosaic_0001>
module attributes {stable_mosaic.version = 11 : i64} {
  func.func @_psp_bottleneck_kernel(%arg0: i32, %arg1: i32, %arg2: i32, %arg3: memref<1x256x4xf32, #tpu.memory_space<vmem>>, %arg4: memref<256x128xf32, #tpu.memory_space<vmem>>, %arg5: memref<1x128x128xf32, #tpu.memory_space<vmem>>, %arg6: memref<4x128xf32, #tpu.memory_space<vmem>>, %arg7: memref<1x128xf32, #tpu.memory_space<vmem>>, %arg8: memref<1x256x128xf32, #tpu.memory_space<vmem>>) attributes {dimension_semantics = [#tpu.dimension_semantics<parallel>, #tpu.dimension_semantics<parallel>, #tpu.dimension_semantics<parallel>], iteration_bounds = array<i64: 2, 1, 1>, scalar_prefetch = 0 : i64, scratch_operands = 0 : i64, tpu.core_type = #tpu.core_type<tc>, window_params = [{transform_indices = @transform_0, window_bounds = array<i64: 1, 256, 4>}, {transform_indices = @transform_1, window_bounds = array<i64: 256, 128>}, {transform_indices = @transform_2, window_bounds = array<i64: 1, 128, 128>}, {transform_indices = @transform_3, window_bounds = array<i64: 4, 128>}, {transform_indices = @transform_4, window_bounds = array<i64: 1, 128>}, {transform_indices = @transform_5, window_bounds = array<i64: 1, 256, 128>}]} {
    %c0 = arith.constant 0 : index
    %c0_0 = arith.constant 0 : index
    %c0_1 = arith.constant 0 : index
    %0 = vector.load %arg3[%c0, %c0_0, %c0_1] : memref<1x256x4xf32, #tpu.memory_space<vmem>>, vector<1x256x4xf32>
    %1 = vector.shape_cast %0 : vector<1x256x4xf32> to vector<256x4xf32>
    %c0_2 = arith.constant 0 : index
    %c0_3 = arith.constant 0 : index
    %2 = vector.load %arg6[%c0_2, %c0_3] : memref<4x128xf32, #tpu.memory_space<vmem>>, vector<4x128xf32>
    %cst = arith.constant dense<0.000000e+00> : vector<256x128xf32>
    %3 = tpu.matmul %1, %2, %cst {dimension_numbers = #tpu.dot_dimension_numbers<[1], [0], [0], [1], [0, 0, 1, 1], [], []>} : vector<256x4xf32>, vector<4x128xf32>, vector<256x128xf32> -> vector<256x128xf32>
    %c0_4 = arith.constant 0 : index
    %c0_5 = arith.constant 0 : index
    %4 = vector.load %arg4[%c0_4, %c0_5] : memref<256x128xf32, #tpu.memory_space<vmem>>, vector<256x128xf32>
    %c0_6 = arith.constant 0 : index
    %c0_7 = arith.constant 0 : index
    %c0_8 = arith.constant 0 : index
    %5 = vector.load %arg5[%c0_6, %c0_7, %c0_8] : memref<1x128x128xf32, #tpu.memory_space<vmem>>, vector<1x128x128xf32>
    %6 = vector.shape_cast %5 : vector<1x128x128xf32> to vector<128x128xf32>
    %cst_9 = arith.constant dense<0.000000e+00> : vector<256x128xf32>
    %7 = tpu.matmul %4, %6, %cst_9 {dimension_numbers = #tpu.dot_dimension_numbers<[1], [0], [0], [1], [0, 0, 1, 1], [], []>} : vector<256x128xf32>, vector<128x128xf32>, vector<256x128xf32> -> vector<256x128xf32>
    %8 = arith.addf %3, %7 : vector<256x128xf32>
    %c0_10 = arith.constant 0 : index
    %c0_11 = arith.constant 0 : index
    %9 = vector.load %arg7[%c0_10, %c0_11] : memref<1x128xf32, #tpu.memory_space<vmem>>, vector<1x128xf32>
    %10 = vector.broadcast %9 : vector<1x128xf32> to vector<256x128xf32>
    %11 = arith.addf %8, %10 : vector<256x128xf32>
    %cst_12 = arith.constant 0.000000e+00 : f32
    %12 = vector.broadcast %cst_12 : f32 to vector<256x128xf32>
    %13 = arith.maximumf %11, %12 : vector<256x128xf32>
    %c0_13 = arith.constant 0 : index
    %c0_14 = arith.constant 0 : index
    %c0_15 = arith.constant 0 : index
    %14 = vector.load %arg8[%c0_13, %c0_14, %c0_15] : memref<1x256x128xf32, #tpu.memory_space<vmem>>, vector<1x256x128xf32>
    %15 = vector.shape_cast %14 : vector<1x256x128xf32> to vector<256x128xf32>
    %16 = vector.shape_cast %13 : vector<256x128xf32> to vector<1x256x128xf32>
    tpu.vector_store %arg8[%c0_13, %c0_14, %c0_15], %16 {strides = array<i32>} : memref<1x256x128xf32, #tpu.memory_space<vmem>>, vector<1x256x128xf32>,
    return
  }
  func.func @transform_0(%arg0: i32, %arg1: i32, %arg2: i32) -> (i32, i32, i32) {
    %c0_i32 = arith.constant 0 : i32
    %c0_i32_0 = arith.constant 0 : i32
    return %arg0, %arg1, %c0_i32 : i32, i32, i32
  }
  func.func @transform_1(%arg0: i32, %arg1: i32, %arg2: i32) -> (i32, i32) {
    %c0_i32 = arith.constant 0 : i32
    %c0_i32_0 = arith.constant 0 : i32
    return %arg1, %c0_i32 : i32, i32
  }
  func.func @transform_2(%arg0: i32, %arg1: i32, %arg2: i32) -> (i32, i32, i32) {
    %c0_i32 = arith.constant 0 : i32
    %c0_i32_0 = arith.constant 0 : i32
    return %arg0, %c0_i32, %arg2 : i32, i32, i32
  }
  func.func @transform_3(%arg0: i32, %arg1: i32, %arg2: i32) -> (i32, i32) {
    %c0_i32 = arith.constant 0 : i32
    %c0_i32_0 = arith.constant 0 : i32
    return %c0_i32, %arg2 : i32, i32
  }
  func.func @transform_4(%arg0: i32, %arg1: i32, %arg2: i32) -> (i32, i32) {
    %c0_i32 = arith.constant 0 : i32
    %c0_i32_0 = arith.constant 0 : i32
    return %c0_i32, %arg2 : i32, i32
  }
  func.func @transform_5(%arg0: i32, %arg1: i32, %arg2: i32) -> (i32, i32, i32) {
    %c0_i32 = arith.constant 0 : i32
    return %arg0, %arg1, %arg2 : i32, i32, i32
  }
}

</mosaic_0001>

<llo_original>
// kernel: downsample_forward.1
$region0: #{downsample_forward.1}
  #allocation0 [shape = 'u32[]', space=smem, size = 0x4, offset = 0x4, fixed_abs, tag = 'smem constant byte address 0x4 - core index']
  #allocation1 [shape = 'u32[144,128]{1,0:T(1,128)}', space=vmem, size = 0x12000, scoped, tag = 'internal scratch']
  %s0 = inlined_call_operand.vmem [shape: f32[2,256,4], index: 0, kind: input, shape index: {}]
  %s1 = inlined_call_operand.vmem [shape: f32[256,128], index: 1, kind: input, shape index: {}]
  %s2 = inlined_call_operand.vmem [shape: f32[2,128,128], index: 2, kind: input, shape index: {}]
  %s3 = inlined_call_operand.vmem [shape: f32[4,128], index: 3, kind: input, shape index: {}]
  %s4 = inlined_call_operand.vmem [shape: f32[1,128], index: 4, kind: input, shape index: {}]
  %s5 = inlined_call_operand.hbm [shape: f32[2,256,128], index: 5, kind: output, shape index: {}]
  %s6 = sld [smem:[#allocation0]]
  $region53: #{downsample_forward.1} parent=0
    _
  %s8 = ssub.s32 1, %s6
  %s9 = scalar_select 0, %s8, %s6
  $region1: #{downsample_forward.1} parent=0
    #allocation2 [shape = 'u8[262144]{0}', space=vmem, size = 0x40000, scoped, tag = 'output window, operand 0']
    #allocation3 [shape = 's32[2]{0}', space=sflag, size = 0x8, scoped, tag = 'scoped memory for downsample_forward.1']
    %10 = vsyncpa [#allocation3], 0
    %s11 = scalar_lea.sflag [#allocation3], 1
    %12 = vsyncpa %s11, 0
    loop: start=0, step=1, limit=4
    $region2: #{downsample_forward.1} parent=1 // loop_pre_header
      _
    $region3: #{downsample_forward.1} parent=1 // loop_header
      %s14 = sphi 0, %s18
      %p15 = scmp.ge.s32.totalorder %s14, 4
      %s21 = sphi 0, %s40
      %s22 = sphi 0, %s36
      %s23 = sphi 0, %s32
      %s24 = sphi 0, %s21
      %s25 = sphi 0, %s22
      %s26 = sphi 0, %s23
      %s27 = sphi 0, %s24
      %s28 = sphi 0, %s25
      %s29 = sphi 0, %s26
      %s45 = sphi 0, %s47
      %s48 = sphi 0, %s45
      %s49 = sphi 0, %s48
      %s65 = sphi 0, %s49
      %s71 = sphi 0, %s73
      %s74 = sphi 0, %s71
      %s75 = sphi 0, %s74
      %s91 = sphi 0, %s75
      %s99 = sphi 0, %s101
      %s102 = sphi 0, %s99
      %s103 = sphi 0, %s102
      %s119 = sphi 0, %s103
      %s125 = sphi 0, %s127
      %s128 = sphi 0, %s125
      %s129 = sphi 0, %s128
      %s145 = sphi 0, %s129
      %s151 = sphi 0, %s153
      %s154 = sphi 0, %s151
      %s155 = sphi 0, %s154
      %s171 = sphi 0, %s155
      %s181 = sphi 0, %s183
      %s184 = sphi 0, %s181
      %s185 = sphi 0, %s184
      %s201 = sphi 0, %s185
    $region4: #{downsample_forward.1} parent=1 // loop_header_branch
      %17 = sbr.rel (%p15) target = $region8
    $region5: #{downsample_forward.1} parent=1 // loop_body
      %s19 = ssub.s32 %s14, 1
      %s20 = ssub.s32 %s14, 2
      %s30 = sadd.s32 1, %s23
      %p31 = scmp.ge.s32.totalorder %s30, 1
      %s32 = scalar_select %p31, 0, %s30
      %s33 = sadd.s32 1, %s22
      %s34 = scalar_select %p31, %s33, %s22
      %p35 = scmp.ge.s32.totalorder %s34, 1
      %s36 = scalar_select %p35, 0, %s34
      %s37 = sadd.s32 1, %s21
      %s38 = scalar_select %p35, %s37, %s21
      %p39 = scmp.ge.s32.totalorder %s38, 2
      %s40 = scalar_select %p39, 0, %s38
      %s41 = ssub.s32 %s21, %s40
      %s42 = ssub.s32 %s22, %s36
      %s43 = sor.u32 %s41, %s42
      %p44 = scmp.eq.s32.totalorder %s43, 0
      %s46 = sadd.s32 %s45, 1
      %s47 = scalar_select %p44, %s45, %s46
      %p50 = pneg %p44
      %p51 = scmp.eq.s32.totalorder %s14, 1
      %p52 = por %p50, %p51
      %p53 = scmp.ne.s32.totalorder %s45, %s48
      %p54 = scmp.eq.s32.totalorder %s14, 0
      %p55 = por %p53, %p54
      %p56 = scmp.ne.s32.totalorder %s45, %s48
      %p57 = scmp.eq.s32.totalorder %s19, 1
      %p58 = por %p56, %p57
      %p59 = scmp.ne.s32.totalorder %s48, %s49
      %p60 = scmp.eq.s32.totalorder %s19, 0
      %p61 = por %p59, %p60
      %p62 = scmp.ne.s32.totalorder %s48, %s49
      %p63 = scmp.eq.s32.totalorder %s20, 1
      %p64 = por %p62, %p63
      %p66 = scmp.ne.s32.totalorder %s49, %s65
      %p67 = scmp.eq.s32.totalorder %s20, 0
      %p68 = por %p66, %p67
      %s69 = ssub.s32 %s22, %s36
      %p70 = scmp.eq.s32.totalorder %s69, 0
      %s72 = sadd.s32 %s71, 1
      %s73 = scalar_select %p70, %s71, %s72
      %p76 = pneg %p70
      %p77 = scmp.eq.s32.totalorder %s14, 1
      %p78 = por %p76, %p77
      %p79 = scmp.ne.s32.totalorder %s71, %s74
      %p80 = scmp.eq.s32.totalorder %s14, 0
      %p81 = por %p79, %p80
      %p82 = scmp.ne.s32.totalorder %s71, %s74
      %p83 = scmp.eq.s32.totalorder %s19, 1
      %p84 = por %p82, %p83
      %p85 = scmp.ne.s32.totalorder %s74, %s75
      %p86 = scmp.eq.s32.totalorder %s19, 0
      %p87 = por %p85, %p86
      %p88 = scmp.ne.s32.totalorder %s74, %s75
      %p89 = scmp.eq.s32.totalorder %s20, 1
      %p90 = por %p88, %p89
      %p92 = scmp.ne.s32.totalorder %s75, %s91
      %p93 = scmp.eq.s32.totalorder %s20, 0
      %p94 = por %p92, %p93
      %s95 = ssub.s32 %s21, %s40
      %s96 = ssub.s32 %s23, %s32
      %s97 = sor.u32 %s95, %s96
      %p98 = scmp.eq.s32.totalorder %s97, 0
      %s100 = sadd.s32 %s99, 1
      %s101 = scalar_select %p98, %s99, %s100
      %p104 = pneg %p98
      %p105 = scmp.eq.s32.totalorder %s14, 1
      %p106 = por %p104, %p105
      %p107 = scmp.ne.s32.totalorder %s99, %s102
      %p108 = scmp.eq.s32.totalorder %s14, 0
      %p109 = por %p107, %p108
      %p110 = scmp.ne.s32.totalorder %s99, %s102
      %p111 = scmp.eq.s32.totalorder %s19, 1
      %p112 = por %p110, %p111
      %p113 = scmp.ne.s32.totalorder %s102, %s103
      %p114 = scmp.eq.s32.totalorder %s19, 0
      %p115 = por %p113, %p114
      %p116 = scmp.ne.s32.totalorder %s102, %s103
      %p117 = scmp.eq.s32.totalorder %s20, 1
      %p118 = por %p116, %p117
      %p120 = scmp.ne.s32.totalorder %s103, %s119
      %p121 = scmp.eq.s32.totalorder %s20, 0
      %p122 = por %p120, %p121
      %s123 = ssub.s32 %s23, %s32
      %p124 = scmp.eq.s32.totalorder %s123, 0
      %s126 = sadd.s32 %s125, 1
      %s127 = scalar_select %p124, %s125, %s126
      %p130 = pneg %p124
      %p131 = scmp.eq.s32.totalorder %s14, 1
      %p132 = por %p130, %p131
      %p133 = scmp.ne.s32.totalorder %s125, %s128
      %p134 = scmp.eq.s32.totalorder %s14, 0
      %p135 = por %p133, %p134
      %p136 = scmp.ne.s32.totalorder %s125, %s128
      %p137 = scmp.eq.s32.totalorder %s19, 1
      %p138 = por %p136, %p137
      %p139 = scmp.ne.s32.totalorder %s128, %s129
      %p140 = scmp.eq.s32.totalorder %s19, 0
      %p141 = por %p139, %p140
      %p142 = scmp.ne.s32.totalorder %s128, %s129
      %p143 = scmp.eq.s32.totalorder %s20, 1
      %p144 = por %p142, %p143
      %p146 = scmp.ne.s32.totalorder %s129, %s145
      %p147 = scmp.eq.s32.totalorder %s20, 0
      %p148 = por %p146, %p147
      %s149 = ssub.s32 %s23, %s32
      %p150 = scmp.eq.s32.totalorder %s149, 0
      %s152 = sadd.s32 %s151, 1
      %s153 = scalar_select %p150, %s151, %s152
      %p156 = pneg %p150
      %p157 = scmp.eq.s32.totalorder %s14, 1
      %p158 = por %p156, %p157
      %p159 = scmp.ne.s32.totalorder %s151, %s154
      %p160 = scmp.eq.s32.totalorder %s14, 0
      %p161 = por %p159, %p160
      %p162 = scmp.ne.s32.totalorder %s151, %s154
      %p163 = scmp.eq.s32.totalorder %s19, 1
      %p164 = por %p162, %p163
      %p165 = scmp.ne.s32.totalorder %s154, %s155
      %p166 = scmp.eq.s32.totalorder %s19, 0
      %p167 = por %p165, %p166
      %p168 = scmp.ne.s32.totalorder %s154, %s155
      %p169 = scmp.eq.s32.totalorder %s20, 1
      %p170 = por %p168, %p169
      %p172 = scmp.ne.s32.totalorder %s155, %s171
      %p173 = scmp.eq.s32.totalorder %s20, 0
      %p174 = por %p172, %p173
      %s175 = ssub.s32 %s21, %s40
      %s176 = ssub.s32 %s22, %s36
      %s177 = sor.u32 %s175, %s176
      %s178 = ssub.s32 %s23, %s32
      %s179 = sor.u32 %s177, %s178
      %p180 = scmp.eq.s32.totalorder %s179, 0
      %s182 = sadd.s32 %s181, 1
      %s183 = scalar_select %p180, %s181, %s182
      %p186 = pneg %p180
      %p187 = scmp.eq.s32.totalorder %s14, 1
      %p188 = por %p186, %p187
      %p189 = scmp.ne.s32.totalorder %s181, %s184
      %p190 = scmp.eq.s32.totalorder %s14, 0
      %p191 = por %p189, %p190
      %p192 = scmp.ne.s32.totalorder %s181, %s184
      %p193 = scmp.eq.s32.totalorder %s19, 1
      %p194 = por %p192, %p193
      %p195 = scmp.ne.s32.totalorder %s184, %s185
      %p196 = scmp.eq.s32.totalorder %s19, 0
      %p197 = por %p195, %p196
      %p198 = scmp.ne.s32.totalorder %s184, %s185
      %p199 = scmp.eq.s32.totalorder %s20, 1
      %p200 = por %p198, %p199
      %p202 = scmp.ne.s32.totalorder %s185, %s201
      %p203 = scmp.eq.s32.totalorder %s20, 0
      %p204 = por %p202, %p203
      %p205 = scmp.le.s32.totalorder 1, %s14
      %p206 = scmp.lt.s32.totalorder %s14, 3
      %p207 = pnand %p205, %p206
      %p208 = pneg %p207
      // Predicated region
      $region9: #{downsample_forward.1} parent=5 // pred_check
        _
      $region10: #{downsample_forward.1} parent=5 // pred_check_branch
        %210 = sbr.rel (%p207) target = $region12
      $region11: #{downsample_forward.1} parent=5 // pred_region
        %s211 = ssub.s32 %s14, 1
        // Predicated region
        $region13: #{downsample_forward.1} parent=11 // pred_check
          %p212 = pneg %p87
        $region14: #{downsample_forward.1} parent=11 // pred_check_branch
          %214 = sbr.rel (%p212) target = $region16
        $region15: #{downsample_forward.1} parent=11 // pred_region
          %s215 = smul.u32 32, %s25
          %p216 = scmp.lt.s32.totalorder %s215, 31
          %s217 = scalar_select %p216, %s215, 31
          %s218 = smul.addr %s217, 8
          %s219 = scalar_lea.vmem %s1, %s218
          %s220 = smul.u32 32, %s25
        $region16: #{downsample_forward.1} parent=11 // pred_fallthru
          _
        // Predicated region
        $region17: #{downsample_forward.1} parent=11 // pred_check
          %p221 = pneg %p141
        $region18: #{downsample_forward.1} parent=11 // pred_check_branch
          %223 = sbr.rel (%p221) target = $region20
        $region19: #{downsample_forward.1} parent=11 // pred_region
          %p224 = scmp.lt.s32.totalorder %s26, 0
          %s225 = scalar_select %p224, %s26, 0
          %s226 = smul.addr %s225, 4
          %s227 = scalar_lea.vmem %s3, %s226
        $region20: #{downsample_forward.1} parent=11 // pred_fallthru
          _
        // Predicated region
        $region21: #{downsample_forward.1} parent=11 // pred_check
          %p228 = pneg %p167
        $region22: #{downsample_forward.1} parent=11 // pred_check_branch
          %230 = sbr.rel (%p228) target = $region24
        $region23: #{downsample_forward.1} parent=11 // pred_region
          %p231 = scmp.lt.s32.totalorder %s26, 0
          %s232 = scalar_select %p231, %s26, 0
          %s233 = scalar_lea.vmem %s4, %s232
        $region24: #{downsample_forward.1} parent=11 // pred_fallthru
          _
      $region12: #{downsample_forward.1} parent=5 // pred_fallthru
        _
      %p234 = scmp.lt.s32.totalorder %s14, 2
      // Predicated region
      $region25: #{downsample_forward.1} parent=5 // pred_check
        %p235 = pneg %p234
      $region26: #{downsample_forward.1} parent=5 // pred_check_branch
        %237 = sbr.rel (%p235) target = $region28
      $region27: #{downsample_forward.1} parent=5 // pred_region
        // Predicated region
        $region29: #{downsample_forward.1} parent=27 // pred_check
          %p238 = pneg %p55
        $region30: #{downsample_forward.1} parent=27 // pred_check_branch
          %240 = sbr.rel (%p238) target = $region32
        $region31: #{downsample_forward.1} parent=27 // pred_region
          %s241 = smul.u32 32, %s22
          %p242 = scmp.lt.s32.totalorder %s21, 1
          %s243 = scalar_select %p242, %s21, 1
          %p244 = scmp.lt.s32.totalorder %s241, 31
          %s245 = scalar_select %p244, %s241, 31
          %s246 = smul.addr %s243, 32
          %s247 = sadd.s32 %s245, %s246
          %s248 = smul.addr %s247, 8
          %s249 = scalar_lea.vmem %s0, %s248
          %s250 = smul.u32 32, %s22
        $region32: #{downsample_forward.1} parent=27 // pred_fallthru
          _
        // Predicated region
        $region33: #{downsample_forward.1} parent=27 // pred_check
          %p251 = pneg %p109
        $region34: #{downsample_forward.1} parent=27 // pred_check_branch
          %253 = sbr.rel (%p251) target = $region36
        $region35: #{downsample_forward.1} parent=27 // pred_region
          %p254 = scmp.lt.s32.totalorder %s21, 1
          %s255 = scalar_select %p254, %s21, 1
          %p256 = scmp.lt.s32.totalorder %s23, 0
          %s257 = scalar_select %p256, %s23, 0
          %s258 = smul.addr %s255, 16
          %s259 = sadd.s32 %s257, %s258
          %s260 = smul.addr %s259, 8
          %s261 = scalar_lea.vmem %s2, %s260
        $region36: #{downsample_forward.1} parent=27 // pred_fallthru
          _
      $region28: #{downsample_forward.1} parent=5 // pred_fallthru
        _
      %p262 = scmp.le.s32.totalorder 1, %s14
      %p263 = scmp.lt.s32.totalorder %s14, 3
      %p264 = pnand %p262, %p263
      %p265 = pneg %p264
      // Predicated region
      $region37: #{downsample_forward.1} parent=5 // pred_check
        _
      $region38: #{downsample_forward.1} parent=5 // pred_check_branch
        %267 = sbr.rel (%p264) target = $region40
      $region39: #{downsample_forward.1} parent=5 // pred_region
        %s268 = ssub.s32 %s14, 1
        %s269 = smul.u32 32, %s25
        %p270 = scmp.lt.s32.totalorder %s24, 1
        %s271 = scalar_select %p270, %s24, 1
        %p272 = scmp.lt.s32.totalorder %s269, 31
        %s273 = scalar_select %p272, %s269, 31
        %s274 = smul.addr %s271, 32
        %s275 = sadd.s32 %s273, %s274
        %s276 = smul.addr %s275, 8
        %s277 = scalar_lea.vmem %s0, %s276
        %p278 = pneg %p61
        %p279 = pneg %p58
        %s280 = smul.u32 32, %s25
        %p281 = scmp.lt.s32.totalorder %s280, 31
        %s282 = scalar_select %p281, %s280, 31
        %s283 = smul.addr %s282, 8
        %s284 = scalar_lea.vmem %s1, %s283
        %p285 = pneg %p87
        %p286 = pneg %p84
        %p287 = scmp.lt.s32.totalorder %s24, 1
        %s288 = scalar_select %p287, %s24, 1
        %p289 = scmp.lt.s32.totalorder %s26, 0
        %s290 = scalar_select %p289, %s26, 0
        %s291 = smul.addr %s288, 16
        %s292 = sadd.s32 %s290, %s291
        %s293 = smul.addr %s292, 8
        %s294 = scalar_lea.vmem %s2, %s293
        %p295 = pneg %p115
        %p296 = pneg %p112
        %p297 = scmp.lt.s32.totalorder %s26, 0
        %s298 = scalar_select %p297, %s26, 0
        %s299 = smul.addr %s298, 4
        %s300 = scalar_lea.vmem %s3, %s299
        %p301 = pneg %p141
        %p302 = pneg %p138
        %p303 = scmp.lt.s32.totalorder %s26, 0
        %s304 = scalar_select %p303, %s26, 0
        %s305 = scalar_lea.vmem %s4, %s304
        %p306 = pneg %p167
        %p307 = pneg %p164
        %p308 = pneg %p197
        %p309 = pneg %p194
        %s310 = sand.u32 %s184, 1
        %s311 = scalar_lea.sflag [#allocation3], %s310
        %s312 = sand.u32 %s184, 1
        %s313 = smul.addr %s312, 256
        %s314 = scalar_lea.vmem [#allocation2], %s313
        %s315 = smul.u32 32, %s25
        %p316 = scmp.lt.s32.totalorder %s24, 1
        %s317 = scalar_select %p316, %s24, 1
        %p318 = scmp.lt.s32.totalorder %s315, 31
        %s319 = scalar_select %p318, %s315, 31
        %s320 = smul.addr %s317, 32
        %s321 = sadd.s32 %s319, %s320
        %s322 = smul.addr %s321, 8
        %s323 = scalar_lea.vmem %s0, %s322
        %s324 = smul.u32 32, %s25
        %s325 = smul.u32 32, %s25
        %p326 = scmp.lt.s32.totalorder %s325, 31
        %s327 = scalar_select %p326, %s325, 31
        %s328 = smul.addr %s327, 8
        %s329 = scalar_lea.vmem %s1, %s328
        %s330 = smul.u32 32, %s25
        %p331 = scmp.lt.s32.totalorder %s24, 1
        %s332 = scalar_select %p331, %s24, 1
        %p333 = scmp.lt.s32.totalorder %s26, 0
        %s334 = scalar_select %p333, %s26, 0
        %s335 = smul.addr %s332, 16
        %s336 = sadd.s32 %s334, %s335
        %s337 = smul.addr %s336, 8
        %s338 = scalar_lea.vmem %s2, %s337
        %p339 = scmp.lt.s32.totalorder %s26, 0
        %s340 = scalar_select %p339, %s26, 0
        %s341 = smul.addr %s340, 4
        %s342 = scalar_lea.vmem %s3, %s341
        %p343 = scmp.lt.s32.totalorder %s26, 0
        %s344 = scalar_select %p343, %s26, 0
        %s345 = scalar_lea.vmem %s4, %s344
        %s346 = smul.u32 32, %s25
        %v347 = vld [vmem:[%s323] sm:$0xff]
        %v348 = vld [vmem:[%s323 + $0x8] sm:$0xff]
        %v349 = vld [vmem:[%s323 + $0x10] sm:$0xff]
        %v350 = vld [vmem:[%s323 + $0x18] sm:$0xff]
        %v351 = vld [vmem:[%s323 + $0x20] sm:$0xff]
        %v352 = vld [vmem:[%s323 + $0x28] sm:$0xff]
        %v353 = vld [vmem:[%s323 + $0x30] sm:$0xff]
        %v354 = vld [vmem:[%s323 + $0x38] sm:$0xff]
        %v355 = vld [vmem:[%s323 + $0x40] sm:$0xff]
        %v356 = vld [vmem:[%s323 + $0x48] sm:$0xff]
        %v357 = vld [vmem:[%s323 + $0x50] sm:$0xff]
        %v358 = vld [vmem:[%s323 + $0x58] sm:$0xff]
        %v359 = vld [vmem:[%s323 + $0x60] sm:$0xff]
        %v360 = vld [vmem:[%s323 + $0x68] sm:$0xff]
        %v361 = vld [vmem:[%s323 + $0x70] sm:$0xff]
        %v362 = vld [vmem:[%s323 + $0x78] sm:$0xff]
        %v363 = vld [vmem:[%s323 + $0x80] sm:$0xff]
        %v364 = vld [vmem:[%s323 + $0x88] sm:$0xff]
        %v365 = vld [vmem:[%s323 + $0x90] sm:$0xff]
        %v366 = vld [vmem:[%s323 + $0x98] sm:$0xff]
        %v367 = vld [vmem:[%s323 + $0xa0] sm:$0xff]
        %v368 = vld [vmem:[%s323 + $0xa8] sm:$0xff]
        %v369 = vld [vmem:[%s323 + $0xb0] sm:$0xff]
        %v370 = vld [vmem:[%s323 + $0xb8] sm:$0xff]
        %v371 = vld [vmem:[%s323 + $0xc0] sm:$0xff]
        %v372 = vld [vmem:[%s323 + $0xc8] sm:$0xff]
        %v373 = vld [vmem:[%s323 + $0xd0] sm:$0xff]
        %v374 = vld [vmem:[%s323 + $0xd8] sm:$0xff]
        %v375 = vld [vmem:[%s323 + $0xe0] sm:$0xff]
        %v376 = vld [vmem:[%s323 + $0xe8] sm:$0xff]
        %v377 = vld [vmem:[%s323 + $0xf0] sm:$0xff]
        %v378 = vld [vmem:[%s323 + $0xf8] sm:$0xff]
        %v379 = vld [vmem:[%s342] sm:$0xf]
        %v380 = vld [vmem:[%s329] sm:$0xff]
        %v381 = vld [vmem:[%s329 + $0x8] sm:$0xff]
        %v382 = vld [vmem:[%s329 + $0x10] sm:$0xff]
        %v383 = vld [vmem:[%s329 + $0x18] sm:$0xff]
        %v384 = vld [vmem:[%s329 + $0x20] sm:$0xff]
        %v385 = vld [vmem:[%s329 + $0x28] sm:$0xff]
        %v386 = vld [vmem:[%s329 + $0x30] sm:$0xff]
        %v387 = vld [vmem:[%s329 + $0x38] sm:$0xff]
        %v388 = vld [vmem:[%s329 + $0x40] sm:$0xff]
        %v389 = vld [vmem:[%s329 + $0x48] sm:$0xff]
        %v390 = vld [vmem:[%s329 + $0x50] sm:$0xff]
        %v391 = vld [vmem:[%s329 + $0x58] sm:$0xff]
        %v392 = vld [vmem:[%s329 + $0x60] sm:$0xff]
        %v393 = vld [vmem:[%s329 + $0x68] sm:$0xff]
        %v394 = vld [vmem:[%s329 + $0x70] sm:$0xff]
        %v395 = vld [vmem:[%s329 + $0x78] sm:$0xff]
        %v396 = vld [vmem:[%s329 + $0x80] sm:$0xff]
        %v397 = vld [vmem:[%s329 + $0x88] sm:$0xff]
        %v398 = vld [vmem:[%s329 + $0x90] sm:$0xff]
        %v399 = vld [vmem:[%s329 + $0x98] sm:$0xff]
        %v400 = vld [vmem:[%s329 + $0xa0] sm:$0xff]
        %v401 = vld [vmem:[%s329 + $0xa8] sm:$0xff]
        %v402 = vld [vmem:[%s329 + $0xb0] sm:$0xff]
        %v403 = vld [vmem:[%s329 + $0xb8] sm:$0xff]
        %v404 = vld [vmem:[%s329 + $0xc0] sm:$0xff]
        %v405 = vld [vmem:[%s329 + $0xc8] sm:$0xff]
        %v406 = vld [vmem:[%s329 + $0xd0] sm:$0xff]
        %v407 = vld [vmem:[%s329 + $0xd8] sm:$0xff]
        %v408 = vld [vmem:[%s329 + $0xe0] sm:$0xff]
        %v409 = vld [vmem:[%s329 + $0xe8] sm:$0xff]
        %v410 = vld [vmem:[%s329 + $0xf0] sm:$0xff]
        %v411 = vld [vmem:[%s329 + $0xf8] sm:$0xff]
        %v412 = vld [vmem:[%s338] sm:$0xff]
        %v413 = vld [vmem:[%s338 + $0x8] sm:$0xff]
        %v414 = vld [vmem:[%s338 + $0x10] sm:$0xff]
        %v415 = vld [vmem:[%s338 + $0x18] sm:$0xff]
        %v416 = vld [vmem:[%s338 + $0x20] sm:$0xff]
        %v417 = vld [vmem:[%s338 + $0x28] sm:$0xff]
        %v418 = vld [vmem:[%s338 + $0x30] sm:$0xff]
        %v419 = vld [vmem:[%s338 + $0x38] sm:$0xff]
        %v420 = vld [vmem:[%s338 + $0x40] sm:$0xff]
        %v421 = vld [vmem:[%s338 + $0x48] sm:$0xff]
        %v422 = vld [vmem:[%s338 + $0x50] sm:$0xff]
        %v423 = vld [vmem:[%s338 + $0x58] sm:$0xff]
        %v424 = vld [vmem:[%s338 + $0x60] sm:$0xff]
        %v425 = vld [vmem:[%s338 + $0x68] sm:$0xff]
        %v426 = vld [vmem:[%s338 + $0x70] sm:$0xff]
        %v427 = vld [vmem:[%s338 + $0x78] sm:$0xff]
        %428 = vmatprep.subr.mxu0 0.0
        %429 = vmatpush1.msra.mxu0 %v412
        %430 = vmatprep.subr.mxu0 0.0
        %431 = vmatpush1.msra.mxu0 %v413
        %432 = vmatprep.subr.mxu0 0.0
        %433 = vmatpush1.msra.mxu0 %v414
        %434 = vmatprep.subr.mxu0 0.0
        %435 = vmatpush1.msra.mxu0 %v415
        %436 = vmatprep.subr.mxu0 0.0
        %437 = vmatpush1.msra.mxu0 %v416
        %438 = vmatprep.subr.mxu0 0.0
        %439 = vmatpush1.msra.mxu0 %v417
        %440 = vmatprep.subr.mxu0 0.0
        %441 = vmatpush1.msra.mxu0 %v418
        %442 = vmatprep.subr.mxu0 0.0
        %443 = vmatpush1.msra.mxu0 %v419
        %444 = vmatprep.subr.mxu0 0.0
        %445 = vmatpush1.msra.mxu0 %v420
        %446 = vmatprep.subr.mxu0 0.0
        %447 = vmatpush1.msra.mxu0 %v421
        %448 = vmatprep.subr.mxu0 0.0
        %449 = vmatpush1.msra.mxu0 %v422
        %450 = vmatprep.subr.mxu0 0.0
        %451 = vmatpush1.msra.mxu0 %v423
        %452 = vmatprep.subr.mxu0 0.0
        %453 = vmatpush1.msra.mxu0 %v424
        %454 = vmatprep.subr.mxu0 0.0
        %455 = vmatpush1.msra.mxu0 %v425
        %456 = vmatprep.subr.mxu0 0.0
        %457 = vmatpush1.msra.mxu0 %v426
        %458 = vmatprep.subr.mxu0 0.0
        %459 = vmatpush1.msra.mxu0 %v427
        %460 = vmatprep.subr.mxu0 0.0
        %461 = vmatpush1.msra.mxu0 0.0
        %462 = vmatprep.subr.mxu0 0.0
        %463 = vmatpush1.msra.mxu0 0.0
        %464 = vmatprep.subr.mxu0 0.0
        %465 = vmatpush1.msra.mxu0 0.0
        %466 = vmatprep.subr.mxu0 0.0
        %467 = vmatpush1.msra.mxu0 0.0
        %468 = vmatprep.subr.mxu0 0.0
        %469 = vmatpush1.msra.mxu0 0.0
        %470 = vmatprep.subr.mxu0 0.0
        %471 = vmatpush1.msra.mxu0 0.0
        %472 = vmatprep.subr.mxu0 0.0
        %473 = vmatpush1.msra.mxu0 0.0
        %474 = vmatprep.subr.mxu0 0.0
        %475 = vmatpush1.msra.mxu0 0.0
        %476 = vmatprep.subr.mxu0 0.0
        %477 = vmatpush1.msra.mxu0 0.0
        %478 = vmatprep.subr.mxu0 0.0
        %479 = vmatpush1.msra.mxu0 0.0
        %480 = vmatprep.subr.mxu0 0.0
        %481 = vmatpush1.msra.mxu0 0.0
        %482 = vmatprep.subr.mxu0 0.0
        %483 = vmatpush1.msra.mxu0 0.0
        %484 = vmatprep.subr.mxu0 0.0
        %485 = vmatpush1.msra.mxu0 0.0
        %486 = vmatprep.subr.mxu0 0.0
        %487 = vmatpush1.msra.mxu0 0.0
        %488 = vmatprep.subr.mxu0 0.0
        %489 = vmatpush1.msra.mxu0 0.0
        %490 = vmatprep.subr.mxu0 0.0
        %491 = vmatpush1.msra.mxu0 0.0
        %492 = vmatprep.mubr.f32.mxu0 0.0
        %493 = vmatmul.mubr.f32.gmra.mrb[0].mxu0 %v380
        %v494 = vpop.f32.mrb[0].mxu0
        %v495 = vadd.f32 0.0, %v494
        %v496 = vpop.f32.mrb[0].mxu0
        %497 = vmatprep.mubr.f32.mxu0 0.0
        %498 = vmatmul.mubr.f32.gmra.mrb[0].mxu0 %v381
        %v499 = vpop.f32.mrb[0].mxu0
        %v500 = vadd.f32 0.0, %v499
        %v501 = vpop.f32.mrb[0].mxu0
        %502 = vmatprep.mubr.f32.mxu0 0.0
        %503 = vmatmul.mubr.f32.gmra.mrb[0].mxu0 %v382
        %v504 = vpop.f32.mrb[0].mxu0
        %v505 = vadd.f32 0.0, %v504
        %v506 = vpop.f32.mrb[0].mxu0
        %507 = vmatprep.mubr.f32.mxu0 0.0
        %508 = vmatmul.mubr.f32.gmra.mrb[0].mxu0 %v383
        %v509 = vpop.f32.mrb[0].mxu0
        %v510 = vadd.f32 0.0, %v509
        %v511 = vpop.f32.mrb[0].mxu0
        %512 = vmatprep.mubr.f32.mxu0 0.0
        %513 = vmatmul.mubr.f32.gmra.mrb[0].mxu0 %v384
        %v514 = vpop.f32.mrb[0].mxu0
        %v515 = vadd.f32 0.0, %v514
        %v516 = vpop.f32.mrb[0].mxu0
        %517 = vmatprep.mubr.f32.mxu0 0.0
        %518 = vmatmul.mubr.f32.gmra.mrb[0].mxu0 %v385
        %v519 = vpop.f32.mrb[0].mxu0
        %v520 = vadd.f32 0.0, %v519
        %v521 = vpop.f32.mrb[0].mxu0
        %522 = vmatprep.mubr.f32.mxu0 0.0
        %523 = vmatmul.mubr.f32.gmra.mrb[0].mxu0 %v386
        %v524 = vpop.f32.mrb[0].mxu0
        %v525 = vadd.f32 0.0, %v524
        %v526 = vpop.f32.mrb[0].mxu0
        %527 = vmatprep.mubr.f32.mxu0 0.0
        %528 = vmatmul.mubr.f32.gmra.mrb[0].mxu0 %v387
        %v529 = vpop.f32.mrb[0].mxu0
        %v530 = vadd.f32 0.0, %v529
        %v531 = vpop.f32.mrb[0].mxu0
        %532 = vmatprep.mubr.f32.mxu0 0.0
        %533 = vmatmul.mubr.f32.gmra.mrb[0].mxu0 %v388
        %v534 = vpop.f32.mrb[0].mxu0
        %v535 = vadd.f32 0.0, %v534
        %v536 = vpop.f32.mrb[0].mxu0
        %537 = vmatprep.mubr.f32.mxu0 0.0
        %538 = vmatmul.mubr.f32.gmra.mrb[0].mxu0 %v389
        %v539 = vpop.f32.mrb[0].mxu0
        %v540 = vadd.f32 0.0, %v539
        %v541 = vpop.f32.mrb[0].mxu0
        %542 = vmatprep.mubr.f32.mxu0 0.0
        %543 = vmatmul.mubr.f32.gmra.mrb[0].mxu0 %v390
        %v544 = vpop.f32.mrb[0].mxu0
        %v545 = vadd.f32 0.0, %v544
        %v546 = vpop.f32.mrb[0].mxu0
        %547 = vmatprep.mubr.f32.mxu0 0.0
        %548 = vmatmul.mubr.f32.gmra.mrb[0].mxu0 %v391
        %v549 = vpop.f32.mrb[0].mxu0
        %v550 = vadd.f32 0.0, %v549
        %v551 = vpop.f32.mrb[0].mxu0
        %552 = vmatprep.mubr.f32.mxu0 0.0
        %553 = vmatmul.mubr.f32.gmra.mrb[0].mxu0 %v392
        %v554 = vpop.f32.mrb[0].mxu0
        %v555 = vadd.f32 0.0, %v554
        %v556 = vpop.f32.mrb[0].mxu0
        %557 = vmatprep.mubr.f32.mxu0 0.0
        %558 = vmatmul.mubr.f32.gmra.mrb[0].mxu0 %v393
        %v559 = vpop.f32.mrb[0].mxu0
        %v560 = vadd.f32 0.0, %v559
        %v561 = vpop.f32.mrb[0].mxu0
        %562 = vmatprep.mubr.f32.mxu0 0.0
        %563 = vmatmul.mubr.f32.gmra.mrb[0].mxu0 %v394
        %v564 = vpop.f32.mrb[0].mxu0
        %v565 = vadd.f32 0.0, %v564
        %v566 = vpop.f32.mrb[0].mxu0
        %567 = vmatprep.mubr.f32.mxu0 0.0
        %568 = vmatmul.mubr.f32.gmra.mrb[0].mxu0 %v395
        %v569 = vpop.f32.mrb[0].mxu0
        %v570 = vadd.f32 0.0, %v569
        %v571 = vpop.f32.mrb[0].mxu0
        %572 = vmatprep.mubr.f32.mxu0 0.0
        %573 = vmatmul.mubr.f32.gmra.mrb[0].mxu0 %v396
        %v574 = vpop.f32.mrb[0].mxu0
        %v575 = vadd.f32 0.0, %v574
        %v576 = vpop.f32.mrb[0].mxu0
        %577 = vmatprep.mubr.f32.mxu0 0.0
        %578 = vmatmul.mubr.f32.gmra.mrb[0].mxu0 %v397
        %v579 = vpop.f32.mrb[0].mxu0
        %v580 = vadd.f32 0.0, %v579
        %v581 = vpop.f32.mrb[0].mxu0
        %582 = vmatprep.mubr.f32.mxu0 0.0
        %583 = vmatmul.mubr.f32.gmra.mrb[0].mxu0 %v398
        %v584 = vpop.f32.mrb[0].mxu0
        %v585 = vadd.f32 0.0, %v584
        %v586 = vpop.f32.mrb[0].mxu0
        %587 = vmatprep.mubr.f32.mxu0 0.0
        %588 = vmatmul.mubr.f32.gmra.mrb[0].mxu0 %v399
        %v589 = vpop.f32.mrb[0].mxu0
        %v590 = vadd.f32 0.0, %v589
        %v591 = vpop.f32.mrb[0].mxu0
        %592 = vmatprep.mubr.f32.mxu0 0.0
        %593 = vmatmul.mubr.f32.gmra.mrb[0].mxu0 %v400
        %v594 = vpop.f32.mrb[0].mxu0
        %v595 = vadd.f32 0.0, %v594
        %v596 = vpop.f32.mrb[0].mxu0
        %597 = vmatprep.mubr.f32.mxu0 0.0
        %598 = vmatmul.mubr.f32.gmra.mrb[0].mxu0 %v401
        %v599 = vpop.f32.mrb[0].mxu0
        %v600 = vadd.f32 0.0, %v599
        %v601 = vpop.f32.mrb[0].mxu0
        %602 = vmatprep.mubr.f32.mxu0 0.0
        %603 = vmatmul.mubr.f32.gmra.mrb[0].mxu0 %v402
        %v604 = vpop.f32.mrb[0].mxu0
        %v605 = vadd.f32 0.0, %v604
        %v606 = vpop.f32.mrb[0].mxu0
        %607 = vmatprep.mubr.f32.mxu0 0.0
        %608 = vmatmul.mubr.f32.gmra.mrb[0].mxu0 %v403
        %v609 = vpop.f32.mrb[0].mxu0
        %v610 = vadd.f32 0.0, %v609
        %v611 = vpop.f32.mrb[0].mxu0
        %612 = vmatprep.mubr.f32.mxu0 0.0
        %613 = vmatmul.mubr.f32.gmra.mrb[0].mxu0 %v404
        %v614 = vpop.f32.mrb[0].mxu0
        %v615 = vadd.f32 0.0, %v614
        %v616 = vpop.f32.mrb[0].mxu0
        %617 = vmatprep.mubr.f32.mxu0 0.0
        %618 = vmatmul.mubr.f32.gmra.mrb[0].mxu0 %v405
        %v619 = vpop.f32.mrb[0].mxu0
        %v620 = vadd.f32 0.0, %v619
        %v621 = vpop.f32.mrb[0].mxu0
        %622 = vmatprep.mubr.f32.mxu0 0.0
        %623 = vmatmul.mubr.f32.gmra.mrb[0].mxu0 %v406
        %v624 = vpop.f32.mrb[0].mxu0
        %v625 = vadd.f32 0.0, %v624
        %v626 = vpop.f32.mrb[0].mxu0
        %627 = vmatprep.mubr.f32.mxu0 0.0
        %628 = vmatmul.mubr.f32.gmra.mrb[0].mxu0 %v407
        %v629 = vpop.f32.mrb[0].mxu0
        %v630 = vadd.f32 0.0, %v629
        %v631 = vpop.f32.mrb[0].mxu0
        %632 = vmatprep.mubr.f32.mxu0 0.0
        %633 = vmatmul.mubr.f32.gmra.mrb[0].mxu0 %v408
        %v634 = vpop.f32.mrb[0].mxu0
        %v635 = vadd.f32 0.0, %v634
        %v636 = vpop.f32.mrb[0].mxu0
        %637 = vmatprep.mubr.f32.mxu0 0.0
        %638 = vmatmul.mubr.f32.gmra.mrb[0].mxu0 %v409
        %v639 = vpop.f32.mrb[0].mxu0
        %v640 = vadd.f32 0.0, %v639
        %v641 = vpop.f32.mrb[0].mxu0
        %642 = vmatprep.mubr.f32.mxu0 0.0
        %643 = vmatmul.mubr.f32.gmra.mrb[0].mxu0 %v410
        %v644 = vpop.f32.mrb[0].mxu0
        %v645 = vadd.f32 0.0, %v644
        %v646 = vpop.f32.mrb[0].mxu0
        %647 = vmatprep.mubr.f32.mxu0 0.0
        %648 = vmatmul.mubr.f32.gmra.mrb[0].mxu0 %v411
        %v649 = vpop.f32.mrb[0].mxu0
        %v650 = vadd.f32 0.0, %v649
        %v651 = vpop.f32.mrb[0].mxu0
        %652 = vdwg.mxu0
        %vm653 = vcmask 31744
        %v655 = vsel %vm653, %v347, 0
        %v658 = vsel %vm653, %v348, 0
        %v661 = vsel %vm653, %v349, 0
        %v664 = vsel %vm653, %v350, 0
        %v667 = vsel %vm653, %v351, 0
        %v670 = vsel %vm653, %v352, 0
        %v673 = vsel %vm653, %v353, 0
        %v676 = vsel %vm653, %v354, 0
        %v679 = vsel %vm653, %v355, 0
        %v682 = vsel %vm653, %v356, 0
        %v685 = vsel %vm653, %v357, 0
        %v688 = vsel %vm653, %v358, 0
        %v691 = vsel %vm653, %v359, 0
        %v694 = vsel %vm653, %v360, 0
        %v697 = vsel %vm653, %v361, 0
        %v700 = vsel %vm653, %v362, 0
        %v703 = vsel %vm653, %v363, 0
        %v706 = vsel %vm653, %v364, 0
        %v709 = vsel %vm653, %v365, 0
        %v712 = vsel %vm653, %v366, 0
        %v715 = vsel %vm653, %v367, 0
        %v718 = vsel %vm653, %v368, 0
        %v721 = vsel %vm653, %v369, 0
        %v724 = vsel %vm653, %v370, 0
        %v727 = vsel %vm653, %v371, 0
        %v730 = vsel %vm653, %v372, 0
        %v733 = vsel %vm653, %v373, 0
        %v736 = vsel %vm653, %v374, 0
        %v739 = vsel %vm653, %v375, 0
        %v742 = vsel %vm653, %v376, 0
        %v745 = vsel %vm653, %v377, 0
        %v748 = vsel %vm653, %v378, 0
        %vm750 = vcmask 1043456
        %v752 = vsel %vm750, %v379, 0
        %754 = vmatprep.subr.mxu0 0.0
        %755 = vmatpush1.msra.mxu0 %v752
        %756 = vmatprep.subr.mxu0 0.0
        %757 = vmatpush1.msra.mxu0 0.0
        %758 = vmatprep.subr.mxu0 0.0
        %759 = vmatpush1.msra.mxu0 0.0
        %760 = vmatprep.subr.mxu0 0.0
        %761 = vmatpush1.msra.mxu0 0.0
        %762 = vmatprep.subr.mxu0 0.0
        %763 = vmatpush1.msra.mxu0 0.0
        %764 = vmatprep.subr.mxu0 0.0
        %765 = vmatpush1.msra.mxu0 0.0
        %766 = vmatprep.subr.mxu0 0.0
        %767 = vmatpush1.msra.mxu0 0.0
        %768 = vmatprep.subr.mxu0 0.0
        %769 = vmatpush1.msra.mxu0 0.0
        %770 = vmatprep.subr.mxu0 0.0
        %771 = vmatpush1.msra.mxu0 0.0
        %772 = vmatprep.subr.mxu0 0.0
        %773 = vmatpush1.msra.mxu0 0.0
        %774 = vmatprep.subr.mxu0 0.0
        %775 = vmatpush1.msra.mxu0 0.0
        %776 = vmatprep.subr.mxu0 0.0
        %777 = vmatpush1.msra.mxu0 0.0
        %778 = vmatprep.subr.mxu0 0.0
        %779 = vmatpush1.msra.mxu0 0.0
        %780 = vmatprep.subr.mxu0 0.0
        %781 = vmatpush1.msra.mxu0 0.0
        %782 = vmatprep.subr.mxu0 0.0
        %783 = vmatpush1.msra.mxu0 0.0
        %784 = vmatprep.subr.mxu0 0.0
        %785 = vmatpush1.msra.mxu0 0.0
        %786 = vmatprep.subr.mxu0 0.0
        %787 = vmatpush1.msra.mxu0 0.0
        %788 = vmatprep.subr.mxu0 0.0
        %789 = vmatpush1.msra.mxu0 0.0
        %790 = vmatprep.subr.mxu0 0.0
        %791 = vmatpush1.msra.mxu0 0.0
        %792 = vmatprep.subr.mxu0 0.0
        %793 = vmatpush1.msra.mxu0 0.0
        %794 = vmatprep.subr.mxu0 0.0
        %795 = vmatpush1.msra.mxu0 0.0
        %796 = vmatprep.subr.mxu0 0.0
        %797 = vmatpush1.msra.mxu0 0.0
        %798 = vmatprep.subr.mxu0 0.0
        %799 = vmatpush1.msra.mxu0 0.0
        %800 = vmatprep.subr.mxu0 0.0
        %801 = vmatpush1.msra.mxu0 0.0
        %802 = vmatprep.subr.mxu0 0.0
        %803 = vmatpush1.msra.mxu0 0.0
        %804 = vmatprep.subr.mxu0 0.0
        %805 = vmatpush1.msra.mxu0 0.0
        %806 = vmatprep.subr.mxu0 0.0
        %807 = vmatpush1.msra.mxu0 0.0
        %808 = vmatprep.subr.mxu0 0.0
        %809 = vmatpush1.msra.mxu0 0.0
        %810 = vmatprep.subr.mxu0 0.0
        %811 = vmatpush1.msra.mxu0 0.0
        %812 = vmatprep.subr.mxu0 0.0
        %813 = vmatpush1.msra.mxu0 0.0
        %814 = vmatprep.subr.mxu0 0.0
        %815 = vmatpush1.msra.mxu0 0.0
        %816 = vmatprep.subr.mxu0 0.0
        %817 = vmatpush1.msra.mxu0 0.0
        %818 = vmatprep.mubr.f32.mxu0 0.0
        %819 = vmatmul.mubr.f32.gmra.mrb[0].mxu0 %v655
        %v820 = vpop.f32.mrb[0].mxu0
        %v821 = vadd.f32 %v495, %v820
        %v822 = vpop.f32.mrb[0].mxu0
        %823 = vmatprep.mubr.f32.mxu0 0.0
        %824 = vmatmul.mubr.f32.gmra.mrb[0].mxu0 %v658
        %v825 = vpop.f32.mrb[0].mxu0
        %v826 = vadd.f32 %v500, %v825
        %v827 = vpop.f32.mrb[0].mxu0
        %828 = vmatprep.mubr.f32.mxu0 0.0
        %829 = vmatmul.mubr.f32.gmra.mrb[0].mxu0 %v661
        %v830 = vpop.f32.mrb[0].mxu0
        %v831 = vadd.f32 %v505, %v830
        %v832 = vpop.f32.mrb[0].mxu0
        %833 = vmatprep.mubr.f32.mxu0 0.0
        %834 = vmatmul.mubr.f32.gmra.mrb[0].mxu0 %v664
        %v835 = vpop.f32.mrb[0].mxu0
        %v836 = vadd.f32 %v510, %v835
        %v837 = vpop.f32.mrb[0].mxu0
        %838 = vmatprep.mubr.f32.mxu0 0.0
        %839 = vmatmul.mubr.f32.gmra.mrb[0].mxu0 %v667
        %v840 = vpop.f32.mrb[0].mxu0
        %v841 = vadd.f32 %v515, %v840
        %v842 = vpop.f32.mrb[0].mxu0
        %843 = vmatprep.mubr.f32.mxu0 0.0
        %844 = vmatmul.mubr.f32.gmra.mrb[0].mxu0 %v670
        %v845 = vpop.f32.mrb[0].mxu0
        %v846 = vadd.f32 %v520, %v845
        %v847 = vpop.f32.mrb[0].mxu0
        %848 = vmatprep.mubr.f32.mxu0 0.0
        %849 = vmatmul.mubr.f32.gmra.mrb[0].mxu0 %v673
        %v850 = vpop.f32.mrb[0].mxu0
        %v851 = vadd.f32 %v525, %v850
        %v852 = vpop.f32.mrb[0].mxu0
        %853 = vmatprep.mubr.f32.mxu0 0.0
        %854 = vmatmul.mubr.f32.gmra.mrb[0].mxu0 %v676
        %v855 = vpop.f32.mrb[0].mxu0
        %v856 = vadd.f32 %v530, %v855
        %v857 = vpop.f32.mrb[0].mxu0
        %858 = vmatprep.mubr.f32.mxu0 0.0
        %859 = vmatmul.mubr.f32.gmra.mrb[0].mxu0 %v679
        %v860 = vpop.f32.mrb[0].mxu0
        %v861 = vadd.f32 %v535, %v860
        %v862 = vpop.f32.mrb[0].mxu0
        %863 = vmatprep.mubr.f32.mxu0 0.0
        %864 = vmatmul.mubr.f32.gmra.mrb[0].mxu0 %v682
        %v865 = vpop.f32.mrb[0].mxu0
        %v866 = vadd.f32 %v540, %v865
        %v867 = vpop.f32.mrb[0].mxu0
        %868 = vmatprep.mubr.f32.mxu0 0.0
        %869 = vmatmul.mubr.f32.gmra.mrb[0].mxu0 %v685
        %v870 = vpop.f32.mrb[0].mxu0
        %v871 = vadd.f32 %v545, %v870
        %v872 = vpop.f32.mrb[0].mxu0
        %873 = vmatprep.mubr.f32.mxu0 0.0
        %874 = vmatmul.mubr.f32.gmra.mrb[0].mxu0 %v688
        %v875 = vpop.f32.mrb[0].mxu0
        %v876 = vadd.f32 %v550, %v875
        %v877 = vpop.f32.mrb[0].mxu0
        %878 = vmatprep.mubr.f32.mxu0 0.0
        %879 = vmatmul.mubr.f32.gmra.mrb[0].mxu0 %v691
        %v880 = vpop.f32.mrb[0].mxu0
        %v881 = vadd.f32 %v555, %v880
        %v882 = vpop.f32.mrb[0].mxu0
        %883 = vmatprep.mubr.f32.mxu0 0.0
        %884 = vmatmul.mubr.f32.gmra.mrb[0].mxu0 %v694
        %v885 = vpop.f32.mrb[0].mxu0
        %v886 = vadd.f32 %v560, %v885
        %v887 = vpop.f32.mrb[0].mxu0
        %888 = vmatprep.mubr.f32.mxu0 0.0
        %889 = vmatmul.mubr.f32.gmra.mrb[0].mxu0 %v697
        %v890 = vpop.f32.mrb[0].mxu0
        %v891 = vadd.f32 %v565, %v890
        %v892 = vpop.f32.mrb[0].mxu0
        %893 = vmatprep.mubr.f32.mxu0 0.0
        %894 = vmatmul.mubr.f32.gmra.mrb[0].mxu0 %v700
        %v895 = vpop.f32.mrb[0].mxu0
        %v896 = vadd.f32 %v570, %v895
        %v897 = vpop.f32.mrb[0].mxu0
        %898 = vmatprep.mubr.f32.mxu0 0.0
        %899 = vmatmul.mubr.f32.gmra.mrb[0].mxu0 %v703
        %v900 = vpop.f32.mrb[0].mxu0
        %v901 = vadd.f32 %v575, %v900
        %v902 = vpop.f32.mrb[0].mxu0
        %903 = vmatprep.mubr.f32.mxu0 0.0
        %904 = vmatmul.mubr.f32.gmra.mrb[0].mxu0 %v706
        %v905 = vpop.f32.mrb[0].mxu0
        %v906 = vadd.f32 %v580, %v905
        %v907 = vpop.f32.mrb[0].mxu0
        %908 = vmatprep.mubr.f32.mxu0 0.0
        %909 = vmatmul.mubr.f32.gmra.mrb[0].mxu0 %v709
        %v910 = vpop.f32.mrb[0].mxu0
        %v911 = vadd.f32 %v585, %v910
        %v912 = vpop.f32.mrb[0].mxu0
        %913 = vmatprep.mubr.f32.mxu0 0.0
        %914 = vmatmul.mubr.f32.gmra.mrb[0].mxu0 %v712
        %v915 = vpop.f32.mrb[0].mxu0
        %v916 = vadd.f32 %v590, %v915
        %v917 = vpop.f32.mrb[0].mxu0
        %918 = vmatprep.mubr.f32.mxu0 0.0
        %919 = vmatmul.mubr.f32.gmra.mrb[0].mxu0 %v715
        %v920 = vpop.f32.mrb[0].mxu0
        %v921 = vadd.f32 %v595, %v920
        %v922 = vpop.f32.mrb[0].mxu0
        %923 = vmatprep.mubr.f32.mxu0 0.0
        %924 = vmatmul.mubr.f32.gmra.mrb[0].mxu0 %v718
        %v925 = vpop.f32.mrb[0].mxu0
        %v926 = vadd.f32 %v600, %v925
        %v927 = vpop.f32.mrb[0].mxu0
        %928 = vmatprep.mubr.f32.mxu0 0.0
        %929 = vmatmul.mubr.f32.gmra.mrb[0].mxu0 %v721
        %v930 = vpop.f32.mrb[0].mxu0
        %v931 = vadd.f32 %v605, %v930
        %v932 = vpop.f32.mrb[0].mxu0
        %933 = vmatprep.mubr.f32.mxu0 0.0
        %934 = vmatmul.mubr.f32.gmra.mrb[0].mxu0 %v724
        %v935 = vpop.f32.mrb[0].mxu0
        %v936 = vadd.f32 %v610, %v935
        %v937 = vpop.f32.mrb[0].mxu0
        %938 = vmatprep.mubr.f32.mxu0 0.0
        %939 = vmatmul.mubr.f32.gmra.mrb[0].mxu0 %v727
        %v940 = vpop.f32.mrb[0].mxu0
        %v941 = vadd.f32 %v615, %v940
        %v942 = vpop.f32.mrb[0].mxu0
        %943 = vmatprep.mubr.f32.mxu0 0.0
        %944 = vmatmul.mubr.f32.gmra.mrb[0].mxu0 %v730
        %v945 = vpop.f32.mrb[0].mxu0
        %v946 = vadd.f32 %v620, %v945
        %v947 = vpop.f32.mrb[0].mxu0
        %948 = vmatprep.mubr.f32.mxu0 0.0
        %949 = vmatmul.mubr.f32.gmra.mrb[0].mxu0 %v733
        %v950 = vpop.f32.mrb[0].mxu0
        %v951 = vadd.f32 %v625, %v950
        %v952 = vpop.f32.mrb[0].mxu0
        %953 = vmatprep.mubr.f32.mxu0 0.0
        %954 = vmatmul.mubr.f32.gmra.mrb[0].mxu0 %v736
        %v955 = vpop.f32.mrb[0].mxu0
        %v956 = vadd.f32 %v630, %v955
        %v957 = vpop.f32.mrb[0].mxu0
        %958 = vmatprep.mubr.f32.mxu0 0.0
        %959 = vmatmul.mubr.f32.gmra.mrb[0].mxu0 %v739
        %v960 = vpop.f32.mrb[0].mxu0
        %v961 = vadd.f32 %v635, %v960
        %v962 = vpop.f32.mrb[0].mxu0
        %963 = vmatprep.mubr.f32.mxu0 0.0
        %964 = vmatmul.mubr.f32.gmra.mrb[0].mxu0 %v742
        %v965 = vpop.f32.mrb[0].mxu0
        %v966 = vadd.f32 %v640, %v965
        %v967 = vpop.f32.mrb[0].mxu0
        %968 = vmatprep.mubr.f32.mxu0 0.0
        %969 = vmatmul.mubr.f32.gmra.mrb[0].mxu0 %v745
        %v970 = vpop.f32.mrb[0].mxu0
        %v971 = vadd.f32 %v645, %v970
        %v972 = vpop.f32.mrb[0].mxu0
        %973 = vmatprep.mubr.f32.mxu0 0.0
        %974 = vmatmul.mubr.f32.gmra.mrb[0].mxu0 %v748
        %v975 = vpop.f32.mrb[0].mxu0
        %v976 = vadd.f32 %v650, %v975
        %v977 = vpop.f32.mrb[0].mxu0
        %978 = vdwg.mxu0
        %v979 = vld [vmem:[%s345] sm:$0x1]
        %v981 = vlaneseq
        %v982 = vshrl.u32 %v981, 7
        %v983 = vsub.s32 0, %v982
        %v984 = vrot.slane %v979, %v983
        %v986 = vadd.f32 %v821, %v984
        %v987 = vadd.f32 %v826, %v984
        %v988 = vadd.f32 %v831, %v984
        %v989 = vadd.f32 %v836, %v984
        %v990 = vadd.f32 %v841, %v984
        %v991 = vadd.f32 %v846, %v984
        %v992 = vadd.f32 %v851, %v984
        %v993 = vadd.f32 %v856, %v984
        %v994 = vadd.f32 %v861, %v984
        %v995 = vadd.f32 %v866, %v984
        %v996 = vadd.f32 %v871, %v984
        %v997 = vadd.f32 %v876, %v984
        %v998 = vadd.f32 %v881, %v984
        %v999 = vadd.f32 %v886, %v984
        %v1000 = vadd.f32 %v891, %v984
        %v1001 = vadd.f32 %v896, %v984
        %v1002 = vadd.f32 %v901, %v984
        %v1003 = vadd.f32 %v906, %v984
        %v1004 = vadd.f32 %v911, %v984
        %v1005 = vadd.f32 %v916, %v984
        %v1006 = vadd.f32 %v921, %v984
        %v1007 = vadd.f32 %v926, %v984
        %v1008 = vadd.f32 %v931, %v984
        %v1009 = vadd.f32 %v936, %v984
        %v1010 = vadd.f32 %v941, %v984
        %v1011 = vadd.f32 %v946, %v984
        %v1012 = vadd.f32 %v951, %v984
        %v1013 = vadd.f32 %v956, %v984
        %v1014 = vadd.f32 %v961, %v984
        %v1015 = vadd.f32 %v966, %v984
        %v1016 = vadd.f32 %v971, %v984
        %v1017 = vadd.f32 %v976, %v984
        %v1018 = vmax.f32 %v986, 0.0
        %v1019 = vmax.f32 %v987, 0.0
        %v1020 = vmax.f32 %v988, 0.0
        %v1021 = vmax.f32 %v989, 0.0
        %v1022 = vmax.f32 %v990, 0.0
        %v1023 = vmax.f32 %v991, 0.0
        %v1024 = vmax.f32 %v992, 0.0
        %v1025 = vmax.f32 %v993, 0.0
        %v1026 = vmax.f32 %v994, 0.0
        %v1027 = vmax.f32 %v995, 0.0
        %v1028 = vmax.f32 %v996, 0.0
        %v1029 = vmax.f32 %v997, 0.0
        %v1030 = vmax.f32 %v998, 0.0
        %v1031 = vmax.f32 %v999, 0.0
        %v1032 = vmax.f32 %v1000, 0.0
        %v1033 = vmax.f32 %v1001, 0.0
        %v1034 = vmax.f32 %v1002, 0.0
        %v1035 = vmax.f32 %v1003, 0.0
        %v1036 = vmax.f32 %v1004, 0.0
        %v1037 = vmax.f32 %v1005, 0.0
        %v1038 = vmax.f32 %v1006, 0.0
        %v1039 = vmax.f32 %v1007, 0.0
        %v1040 = vmax.f32 %v1008, 0.0
        %v1041 = vmax.f32 %v1009, 0.0
        %v1042 = vmax.f32 %v1010, 0.0
        %v1043 = vmax.f32 %v1011, 0.0
        %v1044 = vmax.f32 %v1012, 0.0
        %v1045 = vmax.f32 %v1013, 0.0
        %v1046 = vmax.f32 %v1014, 0.0
        %v1047 = vmax.f32 %v1015, 0.0
        %v1048 = vmax.f32 %v1016, 0.0
        %v1049 = vmax.f32 %v1017, 0.0
        %1050 = vst [vmem:[%s314] sm:$0xff] %v1018
        %1051 = vst [vmem:[%s314 + $0x8] sm:$0xff] %v1019
        %1052 = vst [vmem:[%s314 + $0x10] sm:$0xff] %v1020
        %1053 = vst [vmem:[%s314 + $0x18] sm:$0xff] %v1021
        %1054 = vst [vmem:[%s314 + $0x20] sm:$0xff] %v1022
        %1055 = vst [vmem:[%s314 + $0x28] sm:$0xff] %v1023
        %1056 = vst [vmem:[%s314 + $0x30] sm:$0xff] %v1024
        %1057 = vst [vmem:[%s314 + $0x38] sm:$0xff] %v1025
        %1058 = vst [vmem:[%s314 + $0x40] sm:$0xff] %v1026
        %1059 = vst [vmem:[%s314 + $0x48] sm:$0xff] %v1027
        %1060 = vst [vmem:[%s314 + $0x50] sm:$0xff] %v1028
        %1061 = vst [vmem:[%s314 + $0x58] sm:$0xff] %v1029
        %1062 = vst [vmem:[%s314 + $0x60] sm:$0xff] %v1030
        %1063 = vst [vmem:[%s314 + $0x68] sm:$0xff] %v1031
        %1064 = vst [vmem:[%s314 + $0x70] sm:$0xff] %v1032
        %1065 = vst [vmem:[%s314 + $0x78] sm:$0xff] %v1033
        %1066 = vst [vmem:[%s314 + $0x80] sm:$0xff] %v1034
        %1067 = vst [vmem:[%s314 + $0x88] sm:$0xff] %v1035
        %1068 = vst [vmem:[%s314 + $0x90] sm:$0xff] %v1036
        %1069 = vst [vmem:[%s314 + $0x98] sm:$0xff] %v1037
        %1070 = vst [vmem:[%s314 + $0xa0] sm:$0xff] %v1038
        %1071 = vst [vmem:[%s314 + $0xa8] sm:$0xff] %v1039
        %1072 = vst [vmem:[%s314 + $0xb0] sm:$0xff] %v1040
        %1073 = vst [vmem:[%s314 + $0xb8] sm:$0xff] %v1041
        %1074 = vst [vmem:[%s314 + $0xc0] sm:$0xff] %v1042
        %1075 = vst [vmem:[%s314 + $0xc8] sm:$0xff] %v1043
        %1076 = vst [vmem:[%s314 + $0xd0] sm:$0xff] %v1044
        %1077 = vst [vmem:[%s314 + $0xd8] sm:$0xff] %v1045
        %1078 = vst [vmem:[%s314 + $0xe0] sm:$0xff] %v1046
        %1079 = vst [vmem:[%s314 + $0xe8] sm:$0xff] %v1047
        %1080 = vst [vmem:[%s314 + $0xf0] sm:$0xff] %v1048
        %1081 = vst [vmem:[%s314 + $0xf8] sm:$0xff] %v1049
        %s1082 = sand.u32 %s184, 1
        %s1083 = scalar_lea.sflag [#allocation3], %s1082
        %s1084 = sand.u32 %s184, 1
        %s1085 = smul.addr %s1084, 256
        %s1086 = scalar_lea.vmem [#allocation2], %s1085
        // Predicated region
        $region41: #{downsample_forward.1} parent=39 // pred_check
          %p1087 = pneg %p194
        $region42: #{downsample_forward.1} parent=39 // pred_check_branch
          %1089 = sbr.rel (%p1087) target = $region44
        $region43: #{downsample_forward.1} parent=39 // pred_region
          %s1090 = smul.u32 32, %s25
          %s1092 = ssub.s32 4096, 4096
          %1093 = vsyncadd %s1083, %s1092
          %s1094 = sadd.s32 %s26, %s1090
          %s1095 = smul.addr %s24, 32
          %s1096 = sadd.s32 %s1094, %s1095
          %s1097 = smul.addr %s1096, 128
          %s1098 = scalar_lea.hbm %s5, %s1097
          %s1099 = sshll.u32 %s1086, 4
          %s1100 = int_to_ptr.vmem [resolvable:$true] %s1099
          %1105 = dma.vmem_to_hbm [thread:$0]  %s1100, 4096, %s1098, %s1083, 128, 128, 8
        $region44: #{downsample_forward.1} parent=39 // pred_fallthru
          _
      $region40: #{downsample_forward.1} parent=5 // pred_fallthru
        _
      %p1106 = scmp.le.s32.totalorder 2, %s14
      // Predicated region
      $region45: #{downsample_forward.1} parent=5 // pred_check
        %p1107 = pneg %p1106
      $region46: #{downsample_forward.1} parent=5 // pred_check_branch
        %1109 = sbr.rel (%p1107) target = $region48
      $region47: #{downsample_forward.1} parent=5 // pred_region
        %s1110 = ssub.s32 %s14, 2
        // Predicated region
        $region49: #{downsample_forward.1} parent=47 // pred_check
          %p1111 = pneg %p200
        $region50: #{downsample_forward.1} parent=47 // pred_check_branch
          %1113 = sbr.rel (%p1111) target = $region52
        $region51: #{downsample_forward.1} parent=47 // pred_region
          %s1114 = sand.u32 %s185, 1
          %s1115 = scalar_lea.sflag [#allocation3], %s1114
          %s1116 = sand.u32 %s185, 1
          %s1117 = smul.addr %s1116, 256
          %s1118 = scalar_lea.vmem [#allocation2], %s1117
          %1119 = dma.done %s1115, 4096
        $region52: #{downsample_forward.1} parent=47 // pred_fallthru
          _
      $region48: #{downsample_forward.1} parent=5 // pred_fallthru
        _
    $region6: #{downsample_forward.1} parent=1 // loop_footer
      %s18 = sadd.s32 1, %s14
    $region7: #{downsample_forward.1} parent=1 // loop_footer_branch
      %13 = sbr.rel target = $region3
    $region8: #{downsample_forward.1} parent=1 // loop_exit
      _
    %1120 = vsyncpa [#allocation3], 1
    %s1121 = scalar_lea.sflag [#allocation3], 1
    %1122 = vsyncpa %s1121, 1

</llo_original>
